<compile_context>
chip_gen: v5e
topology: v5e:2x2
jax: 0.10.0
libtpu: 0.0.40
codegen_flags: <defaults>
</compile_context>

<pallas_src>
import math

import jax
import jax.numpy as jnp
from jax.experimental import pallas as pl
from jax.experimental.pallas import tpu as pltpu


def _round_up(x, m):
    return (x + m - 1) // m * m


def _vmem_capacity_bytes():
    # Conservative fallback (v7x physical VMEM) if the query is unavailable.
    try:
        return int(pltpu.get_tpu_info().vmem_capacity_bytes)
    except Exception:
        return 64 * 1024 * 1024


# ----------------------------------------------------------------------------
# Kernel
# ----------------------------------------------------------------------------
def _classify_kernel(x_ref, w_ref, b_ref, o_ref):
    # x arrives f32; cast to bf16 in-kernel (cheap VPU pack) so HBM only ever
    # streams the original f32 tensor once.  MXU accumulates in f32; bias add
    # and final cast stay f32 (v5e-friendly epilogue).
    x_bf = x_ref[...].astype(jnp.bfloat16)
    acc = jnp.dot(x_bf, w_ref[...], preferred_element_type=jnp.float32)
    o_ref[...] = (acc + b_ref[...]).astype(o_ref.dtype)


# ----------------------------------------------------------------------------
# Parameter preparation (done once, outside the forward path)
# ----------------------------------------------------------------------------
def prepare_classify_params(weight_t, bias):
    """Pad + cast the static Linear params once.

    weight_t: (C_in, num_class) f32 (torch weight transposed)
    bias:     (1, num_class)    f32
    """
    C_in, num_class = weight_t.shape
    K_pad = _round_up(C_in, 128)
    N_128 = _round_up(num_class, 128)

    # Resident-weight budget: double-buffered bf16 W <= 8 MiB -> single N block.
    single_n = (2 * K_pad * N_128 * 2) <= (8 << 20)
    # When N must stay tiled, 256 fills v6e/v7x's 256-wide MXU (2 passes on v5e).
    tn = N_128 if single_n else 256
    N_pad = _round_up(num_class, tn)

    if (K_pad, N_pad) != (C_in, num_class):
        w_p = jnp.pad(weight_t, ((0, K_pad - C_in), (0, N_pad - num_class)))
    else:
        w_p = weight_t
    w_p = w_p.astype(jnp.bfloat16)

    if N_pad != num_class:
        b_p = jnp.pad(bias, ((0, 0), (0, N_pad - num_class)))
    else:
        b_p = bias
    b_p = b_p.astype(jnp.float32)

    return {
        "w": w_p,              # (K_pad, N_pad) bf16
        "b": b_p,              # (1, N_pad) f32
        "C_in": C_in,
        "num_class": num_class,
        "K_pad": K_pad,
        "N_pad": N_pad,
        "tn": tn,
        "single_n": single_n,
    }


# ----------------------------------------------------------------------------
# Forward
# ----------------------------------------------------------------------------
def classify_forward(x, params, *, out_dtype=None, use_pallas=True):
    """Linear head y = x @ W + b.

    x: (B, C_in) float32.  Returns (B, num_class) in out_dtype (default x.dtype).
    """
    B, C_in = x.shape
    assert C_in == params["C_in"], "in_channels mismatch"
    num_class = params["num_class"]
    K_pad, N_pad, tn = params["K_pad"], params["N_pad"], params["tn"]
    out_dtype = out_dtype or x.dtype
    out_bytes = jnp.dtype(out_dtype).itemsize

    if not use_pallas:
        # Tiny-shape / fused-upstream fallback: plain XLA dot.
        w = params["w"][:C_in, :num_class].astype(jnp.float32)
        b = params["b"][:, :num_class]
        return (x @ w + b).astype(out_dtype)

    # ---- tile selection -----------------------------------------------------
    vmem_cap = _vmem_capacity_bytes()
    budget = vmem_cap // 2                       # leave headroom for the compiler
    tm_cap = 1024 if vmem_cap >= (100 << 20) else 512   # v5e/v6e vs v7x

    fixed = 2 * K_pad * tn * 2 + 2 * tn * 4      # resident W (2 bufs bf16) + bias
    per_row = 2 * K_pad * 4 + 2 * tn * out_bytes  # streamed x (f32) + out, 2 bufs
    tm_fit = max(8, (budget - fixed) // per_row // 8 * 8)

    tm = min(tm_cap, tm_fit, _round_up(B, 8))
    # Give v7x's second TensorCore work: >= 2 batch tiles whenever B allows.
    if B >= 16 and _round_up(B, tm) // tm < 2:
        tm = _round_up((B + 1) // 2, 8)
    B_pad = _round_up(B, tm)

    # ---- pad x only when needed (f32 stays f32; cast happens in-kernel) -----
    if (B_pad, K_pad) != (B, C_in):
        x_p = jnp.pad(x, ((0, B_pad - B), (0, K_pad - C_in)))
    else:
        x_p = x

    # ---- grid / specs --------------------------------------------------------
    if params["single_n"]:
        grid = (B_pad // tm,)
        in_specs = [
            pl.BlockSpec((tm, K_pad), lambda i: (i, 0)),      # x tile (streamed)
            pl.BlockSpec((K_pad, N_pad), lambda i: (0, 0)),   # W (VMEM-resident)
            pl.BlockSpec((1, N_pad), lambda i: (0, 0)),       # bias (resident)
        ]
        out_specs = pl.BlockSpec((tm, N_pad), lambda i: (i, 0))
        dim_sem = ("parallel",)
    else:
        grid = (B_pad // tm, N_pad // tn)
        in_specs = [
            pl.BlockSpec((tm, K_pad), lambda i, j: (i, 0)),
            pl.BlockSpec((K_pad, tn), lambda i, j: (0, j)),
            pl.BlockSpec((1, tn), lambda i, j: (0, j)),
        ]
        out_specs = pl.BlockSpec((tm, tn), lambda i, j: (i, j))
        dim_sem = ("parallel", "parallel")

    vmem_need = fixed + tm * per_row
    vmem_limit = int(min(vmem_cap * 3 // 4, max(vmem_need * 5 // 4, 32 << 20)))

    cost = pl.CostEstimate(
        flops=2 * B_pad * K_pad * N_pad,
        transcendentals=0,
        bytes_accessed=(B_pad * K_pad * 4 + K_pad * N_pad * 2 + N_pad * 4
                        + B_pad * N_pad * out_bytes),
    )

    out = pl.pallas_call(
        _classify_kernel,
        out_shape=jax.ShapeDtypeStruct((B_pad, N_pad), out_dtype),
        grid=grid,
        in_specs=in_specs,
        out_specs=out_specs,
        compiler_params=pltpu.CompilerParams(
            dimension_semantics=dim_sem,
            vmem_limit_bytes=vmem_limit,
        ),
        cost_estimate=cost,
    )(x_p, params["w"], params["b"])

    if (B_pad, N_pad) != (B, num_class):
        out = out[:B, :num_class]
    return out


# ----------------------------------------------------------------------------
# Init (matches Classify.init_weights: xavier_uniform_ weight, zero bias)
# ----------------------------------------------------------------------------
def init_classify_params(key, in_channels, num_class, dtype=jnp.float32):
    bound = math.sqrt(6.0 / (in_channels + num_class))
    w_torch = jax.random.uniform(
        key, (num_class, in_channels), minval=-bound, maxval=bound, dtype=dtype
    )
    weight_t = w_torch.T                      # (in_channels, num_class)
    bias = jnp.zeros((1, num_class), dtype=dtype)
    return weight_t, bias


if __name__ == "__main__":
    key = jax.random.PRNGKey(0)
    k_x, k_w = jax.random.split(key)

    batch = 8
    in_channels = 32
    num_class = 16

    x = jax.random.normal(k_x, (batch, in_channels), dtype=jnp.float32)
    weight_t, bias = init_classify_params(k_w, in_channels, num_class)
    params = prepare_classify_params(weight_t, bias)

    out = classify_forward(x, params)
    out = jax.block_until_ready(out)
    assert out.shape == (batch, num_class)
    assert out.dtype == jnp.float32

    # Reference 1: same bf16-operand / f32-accumulate math as the kernel.
    ref_bf16 = (
        jnp.dot(x.astype(jnp.bfloat16), weight_t.astype(jnp.bfloat16),
                preferred_element_type=jnp.float32)
        + bias
    ).astype(jnp.float32)
    assert jnp.allclose(out, ref_bf16, atol=1e-3, rtol=1e-3)

    # Reference 2: full-f32 linear layer (looser tolerance for bf16 rounding).
    ref_f32 = x @ weight_t + bias
    assert jnp.allclose(out, ref_f32, atol=5e-2, rtol=5e-2)

    print("KERNEL_OK")
</pallas_src>

<mosaic_0001>
module attributes {stable_mosaic.version = 11 : i64} {
  func.func @_classify_kernel(%arg0: i32, %arg1: memref<8x128xf32, #tpu.memory_space<vmem>>, %arg2: memref<128x128xbf16, #tpu.memory_space<vmem>>, %arg3: memref<1x128xf32, #tpu.memory_space<vmem>>, %arg4: memref<8x128xf32, #tpu.memory_space<vmem>>) attributes {dimension_semantics = [#tpu.dimension_semantics<parallel>], iteration_bounds = array<i64: 1>, scalar_prefetch = 0 : i64, scratch_operands = 0 : i64, tpu.core_type = #tpu.core_type<tc>, window_params = [{transform_indices = @transform_0, window_bounds = array<i64: 8, 128>}, {pipeline_mode = #tpu.pipeline_mode<synchronous>, transform_indices = @transform_1, window_bounds = array<i64: 128, 128>}, {pipeline_mode = #tpu.pipeline_mode<synchronous>, transform_indices = @transform_2, window_bounds = array<i64: 1, 128>}, {transform_indices = @transform_3, window_bounds = array<i64: 8, 128>}]} {
    %c0 = arith.constant 0 : index
    %c0_0 = arith.constant 0 : index
    %0 = vector.load %arg1[%c0, %c0_0] : memref<8x128xf32, #tpu.memory_space<vmem>>, vector<8x128xf32>
    %1 = arith.truncf %0 : vector<8x128xf32> to vector<8x128xbf16>
    %c0_1 = arith.constant 0 : index
    %c0_2 = arith.constant 0 : index
    %2 = vector.load %arg2[%c0_1, %c0_2] : memref<128x128xbf16, #tpu.memory_space<vmem>>, vector<128x128xbf16>
    %cst = arith.constant dense<0.000000e+00> : vector<8x128xf32>
    %3 = tpu.matmul %1, %2, %cst {dimension_numbers = #tpu.dot_dimension_numbers<[1], [0], [0], [1], [0, 0, 1, 1], [], []>} : vector<8x128xbf16>, vector<128x128xbf16>, vector<8x128xf32> -> vector<8x128xf32>
    %c0_3 = arith.constant 0 : index
    %c0_4 = arith.constant 0 : index
    %4 = vector.load %arg3[%c0_3, %c0_4] : memref<1x128xf32, #tpu.memory_space<vmem>>, vector<1x128xf32>
    %5 = vector.broadcast %4 : vector<1x128xf32> to vector<8x128xf32>
    %6 = arith.addf %3, %5 : vector<8x128xf32>
    %c0_5 = arith.constant 0 : index
    %c0_6 = arith.constant 0 : index
    %7 = vector.load %arg4[%c0_5, %c0_6] : memref<8x128xf32, #tpu.memory_space<vmem>>, vector<8x128xf32>
    tpu.vector_store %arg4[%c0_5, %c0_6], %6 {strides = array<i32>} : memref<8x128xf32, #tpu.memory_space<vmem>>, vector<8x128xf32>,
    return
  }
  func.func @transform_0(%arg0: i32) -> (i32, i32) {
    %c0_i32 = arith.constant 0 : i32
    %c0_i32_0 = arith.constant 0 : i32
    return %arg0, %c0_i32 : i32, i32
  }
  func.func @transform_1(%arg0: i32) -> (i32, i32) {
    %c0_i32 = arith.constant 0 : i32
    %c0_i32_0 = arith.constant 0 : i32
    %c0_i32_1 = arith.constant 0 : i32
    return %c0_i32, %c0_i32_0 : i32, i32
  }
  func.func @transform_2(%arg0: i32) -> (i32, i32) {
    %c0_i32 = arith.constant 0 : i32
    %c0_i32_0 = arith.constant 0 : i32
    %c0_i32_1 = arith.constant 0 : i32
    return %c0_i32, %c0_i32_0 : i32, i32
  }
  func.func @transform_3(%arg0: i32) -> (i32, i32) {
    %c0_i32 = arith.constant 0 : i32
    %c0_i32_0 = arith.constant 0 : i32
    return %arg0, %c0_i32 : i32, i32
  }
}

</mosaic_0001>

<llo_original>
// kernel: tpu_custom_call.1
$region0: #{tpu_custom_call.1}
  #allocation0 [shape = 'u32[]', space=smem, size = 0x4, offset = 0x4, fixed_abs, tag = 'smem constant byte address 0x4 - core index']
  #allocation1 [shape = 'u32[72,128]{1,0:T(1,128)}', space=vmem, size = 0x9000, scoped, tag = 'internal scratch']
  %s0 = inlined_call_operand.hbm [shape: f32[8,128], index: 0, kind: input, shape index: {}]
  %s1 = inlined_call_operand.hbm [shape: bf16[128,128], index: 1, kind: input, shape index: {}]
  %s2 = inlined_call_operand.vmem [shape: f32[1,128], index: 2, kind: input, shape index: {}]
  %s3 = inlined_call_operand.hbm [shape: f32[8,128], index: 3, kind: output, shape index: {}]
  %s4 = sld [smem:[#allocation0]]
  $region30: #{tpu_custom_call.1} parent=0
    _
  %s6 = ssub.s32 1, %s4
  %s7 = scalar_select 0, %s6, %s4
  $region1: #{tpu_custom_call.1} parent=0
    #allocation2 [shape = 'u8[4096]{0}', space=vmem, size = 0x1000, scoped, tag = 'input window, operand 0, single buffered']
    #allocation3 [shape = 's32[1]{0}', space=sflag, size = 0x4, scoped, tag = 'scoped memory for tpu_custom_call.1']
    #allocation4 [shape = 's32[1]{0}', space=sflag, size = 0x4, scoped, tag = 'scoped memory for tpu_custom_call.1']
    #allocation5 [shape = 'u8[32768]{0}', space=vmem, size = 0x8000, scoped, tag = 'input window, operand 1, single buffered']
    #allocation6 [shape = 's32[1]{0}', space=sflag, size = 0x4, scoped, tag = 'scoped memory for tpu_custom_call.1']
    #allocation7 [shape = 'u8[4096]{0}', space=vmem, size = 0x1000, scoped, tag = 'output window, operand 0, single buffered']
    %8 = vsyncpa [#allocation3], 0
    %9 = vsyncpa [#allocation6], 0
    %10 = vsyncpa [#allocation4], 0
    // Predicated region
    $region2: #{tpu_custom_call.1} parent=1 // pred_check
      _
    $region3: #{tpu_custom_call.1} parent=1 // pred_check_branch
      %12 = sbr.rel (0) target = $region5
    $region4: #{tpu_custom_call.1} parent=1 // pred_region
      %14 = vsyncadd [#allocation3], 0
      %s16 = sshll.u32 %s0, 4
      %s17 = int_to_ptr.hbm [resolvable:$true] %s16
      %s18 = sshll.u32 [#allocation2], 4
      %s19 = int_to_ptr.vmem [resolvable:$true] %s18
      %21 = dma.hbm_to_vmem [thread:$0]  %s17, 128, %s19, [#allocation3]
    $region5: #{tpu_custom_call.1} parent=1 // pred_fallthru
      _
    // Predicated region
    $region6: #{tpu_custom_call.1} parent=1 // pred_check
      _
    $region7: #{tpu_custom_call.1} parent=1 // pred_check_branch
      %23 = sbr.rel (0) target = $region9
    $region8: #{tpu_custom_call.1} parent=1 // pred_region
      %25 = vsyncadd [#allocation6], 0
      %s26 = sshll.u32 %s1, 4
      %s27 = int_to_ptr.hbm [resolvable:$true] %s26
      %s28 = sshll.u32 [#allocation5], 4
      %s29 = int_to_ptr.vmem [resolvable:$true] %s28
      %34 = dma.hbm_to_vmem [thread:$0]  %s27, 1024, %s29, [#allocation6], 64, 64, 4
    $region9: #{tpu_custom_call.1} parent=1 // pred_fallthru
      _
    // Predicated region
    $region10: #{tpu_custom_call.1} parent=1 // pred_check
      _
    $region11: #{tpu_custom_call.1} parent=1 // pred_check_branch
      %36 = sbr.rel (0) target = $region13
    $region12: #{tpu_custom_call.1} parent=1 // pred_region
      _
    $region13: #{tpu_custom_call.1} parent=1 // pred_fallthru
      _
    // Predicated region
    $region14: #{tpu_custom_call.1} parent=1 // pred_check
      _
    $region15: #{tpu_custom_call.1} parent=1 // pred_check_branch
      %38 = sbr.rel (0) target = $region17
    $region16: #{tpu_custom_call.1} parent=1 // pred_region
      %40 = dma.done [#allocation3], 128
    $region17: #{tpu_custom_call.1} parent=1 // pred_fallthru
      _
    // Predicated region
    $region18: #{tpu_custom_call.1} parent=1 // pred_check
      _
    $region19: #{tpu_custom_call.1} parent=1 // pred_check_branch
      %42 = sbr.rel (0) target = $region21
    $region20: #{tpu_custom_call.1} parent=1 // pred_region
      %44 = dma.done [#allocation6], 1024
    $region21: #{tpu_custom_call.1} parent=1 // pred_fallthru
      _
    %v45 = vld [vmem:[#allocation2] sm:$0xff]
    %v46 = vpack.c.bf16 %v45, %v45
    %v47 = vld [vmem:[#allocation5] sm:$0xf]
    %v48 = vld [vmem:[#allocation5 + $0x4] sm:$0xf]
    %v49 = vld [vmem:[#allocation5 + $0x8] sm:$0xf]
    %v50 = vld [vmem:[#allocation5 + $0xc] sm:$0xf]
    %v51 = vld [vmem:[#allocation5 + $0x10] sm:$0xf]
    %v52 = vld [vmem:[#allocation5 + $0x14] sm:$0xf]
    %v53 = vld [vmem:[#allocation5 + $0x18] sm:$0xf]
    %v54 = vld [vmem:[#allocation5 + $0x1c] sm:$0xf]
    %v55 = vld [vmem:[#allocation5 + $0x20] sm:$0xf]
    %v56 = vld [vmem:[#allocation5 + $0x24] sm:$0xf]
    %v57 = vld [vmem:[#allocation5 + $0x28] sm:$0xf]
    %v58 = vld [vmem:[#allocation5 + $0x2c] sm:$0xf]
    %v59 = vld [vmem:[#allocation5 + $0x30] sm:$0xf]
    %v60 = vld [vmem:[#allocation5 + $0x34] sm:$0xf]
    %v61 = vld [vmem:[#allocation5 + $0x38] sm:$0xf]
    %v62 = vld [vmem:[#allocation5 + $0x3c] sm:$0xf]
    %v63 = vld [vmem:[%s2] sm:$0x1]
    %v65 = vperm.slane %v63, 0
    %v83 = vunpack.c.l.b16 %v47
    %v84 = vunpack.c.l.b16 %v48
    %v85 = vunpack.c.l.b16 %v49
    %v86 = vunpack.c.l.b16 %v50
    %v87 = vunpack.c.l.b16 %v51
    %v88 = vunpack.c.l.b16 %v52
    %v89 = vunpack.c.l.b16 %v53
    %v90 = vunpack.c.l.b16 %v54
    %v91 = vunpack.c.l.b16 %v55
    %v92 = vunpack.c.l.b16 %v56
    %v93 = vunpack.c.l.b16 %v57
    %v94 = vunpack.c.l.b16 %v58
    %v95 = vunpack.c.l.b16 %v59
    %v96 = vunpack.c.l.b16 %v60
    %v97 = vunpack.c.l.b16 %v61
    %v98 = vunpack.c.l.b16 %v62
    %v99 = vpack.c.b16 %v84, %v83
    %v100 = vpack.c.b16 %v86, %v85
    %v101 = vpack.c.b16 %v88, %v87
    %v102 = vpack.c.b16 %v90, %v89
    %v103 = vpack.c.b16 %v92, %v91
    %v104 = vpack.c.b16 %v94, %v93
    %v105 = vpack.c.b16 %v96, %v95
    %v106 = vpack.c.b16 %v98, %v97
    %115 = vmatpush.bf16.msra.mxu0 %v106
    %116 = vmatpush.bf16.msra.mxu0 %v105
    %117 = vmatpush.bf16.msra.mxu0 %v104
    %118 = vmatpush.bf16.msra.mxu0 %v103
    %119 = vmatpush.bf16.msra.mxu0 %v102
    %120 = vmatpush.bf16.msra.mxu0 %v101
    %121 = vmatpush.bf16.msra.mxu0 %v100
    %122 = vmatpush.bf16.msra.mxu0 %v99
    %123 = vmatmul.bf16.gmra.mxu0 %v46
    %v124 = vpop.f32.mrf.mxu0
    %v125 = vadd.f32 %v65, %v124
    %v126 = vpop.f32.mrf.mxu0
    %127 = vdwg.mxu0
    %128 = vst [vmem:[#allocation7] sm:$0xff] %v125
    // Predicated region
    $region22: #{tpu_custom_call.1} parent=1 // pred_check
      _
    $region23: #{tpu_custom_call.1} parent=1 // pred_check_branch
      %130 = sbr.rel (0) target = $region25
    $region24: #{tpu_custom_call.1} parent=1 // pred_region
      %132 = vsyncadd [#allocation4], 0
      %s134 = sshll.u32 [#allocation7], 4
      %s135 = int_to_ptr.vmem [resolvable:$true] %s134
      %s136 = sshll.u32 %s3, 4
      %s137 = int_to_ptr.hbm [resolvable:$true] %s136
      %139 = dma.vmem_to_hbm [thread:$0]  %s135, 128, %s137, [#allocation4]
    $region25: #{tpu_custom_call.1} parent=1 // pred_fallthru
      _
    // Predicated region
    $region26: #{tpu_custom_call.1} parent=1 // pred_check
      _
    $region27: #{tpu_custom_call.1} parent=1 // pred_check_branch
      %141 = sbr.rel (0) target = $region29
    $region28: #{tpu_custom_call.1} parent=1 // pred_region
      %143 = dma.done [#allocation4], 128
    $region29: #{tpu_custom_call.1} parent=1 // pred_fallthru
      _
    %144 = vsyncpa [#allocation3], 1
    %145 = vsyncpa [#allocation6], 1
    %146 = vsyncpa [#allocation4], 1

</llo_original>
